<compile_context>
chip_gen: v7x
topology: tpu7x:2x2x1
jax: 0.10.0
libtpu: 0.0.40
codegen_flags: <defaults>
</compile_context>

<pallas_src>
import functools

import jax
import jax.numpy as jnp
from jax.experimental import pallas as pl
from jax.experimental.pallas import tpu as pltpu


# ------------------------------ Pallas kernel -------------------------------

def _conv_bn_silu_kernel(taps_ref, w_ref, bias_ref, out_ref):
    # taps_ref: (K*Cin, TM)   im2col columns for this pixel tile (pixels on lanes)
    # w_ref:    (Cout, K*Cin) fused (3x3 + centered 1x1), BN-scale-folded weights
    # bias_ref: (Cout, 1)     folded BatchNorm bias
    # out_ref:  (Cout, TM)
    y = jnp.dot(w_ref[...], taps_ref[...], preferred_element_type=jnp.float32)
    y = y + bias_ref[...]
    out_ref[...] = y * jax.nn.sigmoid(y)  # SiLU


# -------------------------------- wrappers -----------------------------------

def _round_up(n, m):
    return (n + m - 1) // m * m


def _choose_tm(m):
    """Pixel-tile width: as large as possible, but keep >=2 grid steps when we
    can (v7x has 2 TensorCores sharded along parallel grid axes)."""
    tm = 512
    while tm > 128 and _round_up(m, tm) // tm < 2:
        tm //= 2
    return tm


def _im2col_cols(x_nhwc, k, stride):
    """x: (N,H,W,Cin) -> taps (K*Cin, M) with M = N*Ho*Wo, plus (M, Ho, Wo)."""
    n, h, w, cin = x_nhwc.shape
    pad = k // 2                                     # autopad(k), d=1
    ho = (h + 2 * pad - k) // stride + 1
    wo = (w + 2 * pad - k) // stride + 1
    xp = jnp.pad(x_nhwc, ((0, 0), (pad, pad), (pad, pad), (0, 0)))
    cols = []
    for kh in range(k):
        for kw in range(k):
            cols.append(xp[:, kh:kh + stride * (ho - 1) + 1:stride,
                           kw:kw + stride * (wo - 1) + 1:stride, :])
    patches = jnp.concatenate(cols, axis=-1)         # (N, Ho, Wo, K*Cin)
    m = n * ho * wo
    taps_t = patches.reshape(m, k * k * cin).T       # (K*Cin, M) pixels-on-lanes
    return taps_t, m, ho, wo


def conv2_forward(x_nchw, params, *, k=3, stride=1):
    """Conv2 forward. Input/output layout: NCHW (matches PyTorch)."""
    w3 = params["conv_w"]        # (k, k, Cin, Cout)  HWIO
    w1 = params["cv2_w"]         # (1, 1, Cin, Cout)
    scale, bias = params["bn_scale"], params["bn_bias"]
    cin, cout = w3.shape[2], w3.shape[3]

    # Fuse the 1x1 branch into the kxk center tap (exact: same stride, 'same'
    # padding makes both branch outputs spatially aligned), then fold BN scale.
    w = w3.at[k // 2, k // 2].add(w1[0, 0])
    w = w * scale[None, None, None, :]
    w_t = w.reshape(k * k * cin, cout).T             # (Cout, K*Cin)

    x = jnp.transpose(x_nchw, (0, 2, 3, 1))          # -> NHWC
    n = x.shape[0]
    taps_t, m, ho, wo = _im2col_cols(x, k, stride)

    tm = _choose_tm(m)
    mp = _round_up(m, tm)
    taps_t = jnp.pad(taps_t, ((0, 0), (0, mp - m)))
    kc = k * k * cin

    out = pl.pallas_call(
        _conv_bn_silu_kernel,
        out_shape=jax.ShapeDtypeStruct((cout, mp), jnp.float32),
        grid=(mp // tm,),
        in_specs=[
            pl.BlockSpec((kc, tm), lambda i: (0, i)),      # taps: tile pixel axis
            pl.BlockSpec((cout, kc), lambda i: (0, 0)),    # weights: resident
            pl.BlockSpec((cout, 1), lambda i: (0, 0)),     # bias: resident
        ],
        out_specs=pl.BlockSpec((cout, tm), lambda i: (0, i)),
        compiler_params=pltpu.CompilerParams(dimension_semantics=("parallel",)),
    )(taps_t, w_t, bias.reshape(cout, 1))

    out = out[:, :m].reshape(cout, n, ho, wo)        # (Cout, N, Ho, Wo)
    return jnp.transpose(out, (1, 0, 2, 3))          # -> NCHW


# --------------------------- parameter synthesis ----------------------------

def init_conv2_params(key, c1, c2, k=3, eps=1e-5):
    k0, k1, k2, k3, k4, k5 = jax.random.split(key, 6)
    conv_w = 0.1 * jax.random.normal(k0, (k, k, c1, c2), jnp.float32)   # HWIO
    cv2_w = 0.1 * jax.random.normal(k1, (1, 1, c1, c2), jnp.float32)
    gamma = 0.5 + jax.random.uniform(k2, (c2,), jnp.float32)
    beta = 0.1 * jax.random.normal(k3, (c2,), jnp.float32)
    mean = 0.1 * jax.random.normal(k4, (c2,), jnp.float32)
    var = 0.5 + jax.random.uniform(k5, (c2,), jnp.float32)
    scale = gamma / jnp.sqrt(var + eps)
    bias = beta - mean * scale
    # TODO(synk): BatchNorm is applied in inference mode (folded running stats);
    # training-mode batch statistics are not modeled.
    return {"conv_w": conv_w, "cv2_w": cv2_w, "bn_scale": scale, "bn_bias": bias}


# ------------------------------ pure-JAX ref --------------------------------

def _ref_forward(x_nchw, params, *, k=3, stride=1):
    w3 = jnp.transpose(params["conv_w"], (3, 2, 0, 1))   # OIHW
    w1 = jnp.transpose(params["cv2_w"], (3, 2, 0, 1))
    p = k // 2
    y = jax.lax.conv_general_dilated(
        x_nchw, w3, (stride, stride), [(p, p), (p, p)],
        dimension_numbers=("NCHW", "OIHW", "NCHW"))
    y = y + jax.lax.conv_general_dilated(
        x_nchw, w1, (stride, stride), [(0, 0), (0, 0)],
        dimension_numbers=("NCHW", "OIHW", "NCHW"))
    scale, bias = params["bn_scale"], params["bn_bias"]
    y = y * scale[None, :, None, None] + bias[None, :, None, None]
    return y * jax.nn.sigmoid(y)


# ---------------------------------- main ------------------------------------

if __name__ == "__main__":
    key = jax.random.PRNGKey(0)
    k_x, k_p = jax.random.split(key)

    N, C1, C2, H, W = 2, 16, 32, 16, 16
    x = jax.random.normal(k_x, (N, C1, H, W), jnp.float32)    # NCHW
    params = init_conv2_params(k_p, C1, C2, k=3)

    fwd = jax.jit(functools.partial(conv2_forward), static_argnames=("k", "stride"))

    # stride 1 ('same' output)
    out1 = jax.block_until_ready(fwd(x, params, k=3, stride=1))
    ref1 = jax.block_until_ready(_ref_forward(x, params, k=3, stride=1))
    assert out1.shape == (N, C2, H, W), out1.shape
    assert jnp.allclose(out1, ref1, atol=1e-4, rtol=1e-4), \
        float(jnp.max(jnp.abs(out1 - ref1)))

    # stride 2 (downsampling)
    out2 = jax.block_until_ready(fwd(x, params, k=3, stride=2))
    ref2 = jax.block_until_ready(_ref_forward(x, params, k=3, stride=2))
    assert out2.shape == (N, C2, H // 2, W // 2), out2.shape
    assert jnp.allclose(out2, ref2, atol=1e-4, rtol=1e-4), \
        float(jnp.max(jnp.abs(out2 - ref2)))

    print("KERNEL_OK")
</pallas_src>

<mosaic_0001>
module attributes {stable_mosaic.version = 11 : i64} {
  func.func @_conv_bn_silu_kernel(%arg0: i32, %arg1: memref<144x256xf32, #tpu.memory_space<vmem>>, %arg2: memref<32x144xf32, #tpu.memory_space<vmem>>, %arg3: memref<32x1xf32, #tpu.memory_space<vmem>>, %arg4: memref<32x256xf32, #tpu.memory_space<vmem>>) attributes {dimension_semantics = [#tpu.dimension_semantics<parallel>], iteration_bounds = array<i64: 2>, scalar_prefetch = 0 : i64, scratch_operands = 0 : i64, tpu.core_type = #tpu.core_type<tc>, window_params = [{transform_indices = @transform_0, window_bounds = array<i64: 144, 256>}, {pipeline_mode = #tpu.pipeline_mode<synchronous>, transform_indices = @transform_1, window_bounds = array<i64: 32, 144>}, {pipeline_mode = #tpu.pipeline_mode<synchronous>, transform_indices = @transform_2, window_bounds = array<i64: 32, 1>}, {transform_indices = @transform_3, window_bounds = array<i64: 32, 256>}]} {
    %c0 = arith.constant 0 : index
    %c0_0 = arith.constant 0 : index
    %0 = vector.load %arg2[%c0, %c0_0] : memref<32x144xf32, #tpu.memory_space<vmem>>, vector<32x144xf32>
    %c0_1 = arith.constant 0 : index
    %c0_2 = arith.constant 0 : index
    %1 = vector.load %arg1[%c0_1, %c0_2] : memref<144x256xf32, #tpu.memory_space<vmem>>, vector<144x256xf32>
    %cst = arith.constant dense<0.000000e+00> : vector<32x256xf32>
    %2 = tpu.matmul %0, %1, %cst {dimension_numbers = #tpu.dot_dimension_numbers<[1], [0], [0], [1], [0, 0, 1, 1], [], []>} : vector<32x144xf32>, vector<144x256xf32>, vector<32x256xf32> -> vector<32x256xf32>
    %c0_3 = arith.constant 0 : index
    %c0_4 = arith.constant 0 : index
    %3 = vector.load %arg3[%c0_3, %c0_4] : memref<32x1xf32, #tpu.memory_space<vmem>>, vector<32x1xf32>
    %4 = vector.broadcast %3 : vector<32x1xf32> to vector<32x256xf32>
    %5 = arith.addf %2, %4 : vector<32x256xf32>
    %6 = arith.negf %5 : vector<32x256xf32>
    %7 = math.exp %6 : vector<32x256xf32>
    %cst_5 = arith.constant 1.000000e+00 : f32
    %8 = vector.broadcast %cst_5 : f32 to vector<32x256xf32>
    %9 = arith.addf %8, %7 : vector<32x256xf32>
    %10 = arith.divf %8, %9 : vector<32x256xf32>
    %11 = arith.mulf %5, %10 : vector<32x256xf32>
    %c0_6 = arith.constant 0 : index
    %c0_7 = arith.constant 0 : index
    %12 = vector.load %arg4[%c0_6, %c0_7] : memref<32x256xf32, #tpu.memory_space<vmem>>, vector<32x256xf32>
    tpu.vector_store %arg4[%c0_6, %c0_7], %11 {strides = array<i32>} : memref<32x256xf32, #tpu.memory_space<vmem>>, vector<32x256xf32>,
    return
  }
  func.func @transform_0(%arg0: i32) -> (i32, i32) {
    %c0_i32 = arith.constant 0 : i32
    %c0_i32_0 = arith.constant 0 : i32
    return %c0_i32, %arg0 : i32, i32
  }
  func.func @transform_1(%arg0: i32) -> (i32, i32) {
    %c0_i32 = arith.constant 0 : i32
    %c0_i32_0 = arith.constant 0 : i32
    %c0_i32_1 = arith.constant 0 : i32
    return %c0_i32, %c0_i32_0 : i32, i32
  }
  func.func @transform_2(%arg0: i32) -> (i32, i32) {
    %c0_i32 = arith.constant 0 : i32
    %c0_i32_0 = arith.constant 0 : i32
    %c0_i32_1 = arith.constant 0 : i32
    return %c0_i32, %c0_i32_0 : i32, i32
  }
  func.func @transform_3(%arg0: i32) -> (i32, i32) {
    %c0_i32 = arith.constant 0 : i32
    %c0_i32_0 = arith.constant 0 : i32
    return %c0_i32, %arg0 : i32, i32
  }
}

</mosaic_0001>

<llo_original>
// kernel: conv2_forward.1
$region0: #{conv2_forward.1}
  #allocation0 [shape = 'u32[]', space=smem, size = 0x4, offset = 0x4, fixed_abs, tag = 'smem constant byte address 0x4 - core index']
  #allocation1 [shape = 'u32[144,128]{1,0:T(1,128)}', space=vmem, size = 0x12000, scoped, tag = 'internal scratch']
  %s0 = inlined_call_operand.vmem [shape: f32[144,512], index: 0, kind: input, shape index: {}]
  %s1 = inlined_call_operand.vmem [shape: f32[32,144], index: 1, kind: input, shape index: {}]
  %s2 = inlined_call_operand.vmem [shape: f32[32,1], index: 2, kind: input, shape index: {}]
  %s3 = inlined_call_operand.vmem [shape: f32[32,512], index: 3, kind: output, shape index: {}]
  %s4 = sld [smem:[#allocation0]]
  $region87: #{conv2_forward.1} parent=0
    _
  %s6 = ssub.s32 1, %s4
  %s7 = scalar_select 0, %s6, %s4
  $region1: #{conv2_forward.1} parent=0
    #allocation2 [shape = 'u8[294912]{0}', space=vmem, size = 0x48000, scoped, tag = 'input window, operand 0']
    #allocation3 [shape = 'u8[65536]{0}', space=vmem, size = 0x10000, scoped, tag = 'output window, operand 0']
    loop: start=0, step=1, limit=4
    $region2: #{conv2_forward.1} parent=1 // loop_pre_header
      _
    $region3: #{conv2_forward.1} parent=1 // loop_header
      %s9 = sphi 0, %s13
      %p10 = scmp.ge.s32.totalorder %s9, 4
      %s19 = sphi 0, %s21
      %s22 = sphi 0, %s19
      %s23 = sphi 0, %s22
      %s39 = sphi 0, %s23
      %s43 = sphi 0, %s43
      %s45 = sphi 0, %s43
      %s46 = sphi 0, %s45
      %s60 = sphi 0, %s46
      %s64 = sphi 0, %s64
      %s66 = sphi 0, %s64
      %s67 = sphi 0, %s66
      %s81 = sphi 0, %s67
      %s87 = sphi 0, %s89
      %s90 = sphi 0, %s87
      %s91 = sphi 0, %s90
      %s107 = sphi 0, %s91
    $region4: #{conv2_forward.1} parent=1 // loop_header_branch
      %12 = sbr.rel (%p10) target = $region8
    $region5: #{conv2_forward.1} parent=1 // loop_body
      %s14 = ssub.s32 %s9, 1
      %s15 = ssub.s32 %s9, 2
      %s16 = sadd.s32 %s9, 1
      %s17 = ssub.s32 %s9, %s16
      %p18 = scmp.eq.s32.totalorder %s17, 0
      %s20 = sadd.s32 %s19, 1
      %s21 = scalar_select %p18, %s19, %s20
      %p24 = pneg %p18
      %p25 = scmp.eq.s32.totalorder %s9, 1
      %p26 = por %p24, %p25
      %p27 = scmp.ne.s32.totalorder %s19, %s22
      %p28 = scmp.eq.s32.totalorder %s9, 0
      %p29 = por %p27, %p28
      %p30 = scmp.ne.s32.totalorder %s19, %s22
      %p31 = scmp.eq.s32.totalorder %s14, 1
      %p32 = por %p30, %p31
      %p33 = scmp.ne.s32.totalorder %s22, %s23
      %p34 = scmp.eq.s32.totalorder %s14, 0
      %p35 = por %p33, %p34
      %p36 = scmp.ne.s32.totalorder %s22, %s23
      %p37 = scmp.eq.s32.totalorder %s15, 1
      %p38 = por %p36, %p37
      %p40 = scmp.ne.s32.totalorder %s23, %s39
      %p41 = scmp.eq.s32.totalorder %s15, 0
      %p42 = por %p40, %p41
      %s44 = sadd.s32 %s43, 1
      %p47 = scmp.eq.s32.totalorder %s9, 1
      %p48 = scmp.ne.s32.totalorder %s43, %s45
      %p49 = scmp.eq.s32.totalorder %s9, 0
      %p50 = por %p48, %p49
      %p51 = scmp.ne.s32.totalorder %s43, %s45
      %p52 = scmp.eq.s32.totalorder %s14, 1
      %p53 = por %p51, %p52
      %p54 = scmp.ne.s32.totalorder %s45, %s46
      %p55 = scmp.eq.s32.totalorder %s14, 0
      %p56 = por %p54, %p55
      %p57 = scmp.ne.s32.totalorder %s45, %s46
      %p58 = scmp.eq.s32.totalorder %s15, 1
      %p59 = por %p57, %p58
      %p61 = scmp.ne.s32.totalorder %s46, %s60
      %p62 = scmp.eq.s32.totalorder %s15, 0
      %p63 = por %p61, %p62
      %s65 = sadd.s32 %s64, 1
      %p68 = scmp.eq.s32.totalorder %s9, 1
      %p69 = scmp.ne.s32.totalorder %s64, %s66
      %p70 = scmp.eq.s32.totalorder %s9, 0
      %p71 = por %p69, %p70
      %p72 = scmp.ne.s32.totalorder %s64, %s66
      %p73 = scmp.eq.s32.totalorder %s14, 1
      %p74 = por %p72, %p73
      %p75 = scmp.ne.s32.totalorder %s66, %s67
      %p76 = scmp.eq.s32.totalorder %s14, 0
      %p77 = por %p75, %p76
      %p78 = scmp.ne.s32.totalorder %s66, %s67
      %p79 = scmp.eq.s32.totalorder %s15, 1
      %p80 = por %p78, %p79
      %p82 = scmp.ne.s32.totalorder %s67, %s81
      %p83 = scmp.eq.s32.totalorder %s15, 0
      %p84 = por %p82, %p83
      %s85 = ssub.s32 %s9, %s16
      %p86 = scmp.eq.s32.totalorder %s85, 0
      %s88 = sadd.s32 %s87, 1
      %s89 = scalar_select %p86, %s87, %s88
      %p92 = pneg %p86
      %p93 = scmp.eq.s32.totalorder %s9, 1
      %p94 = por %p92, %p93
      %p95 = scmp.ne.s32.totalorder %s87, %s90
      %p96 = scmp.eq.s32.totalorder %s9, 0
      %p97 = por %p95, %p96
      %p98 = scmp.ne.s32.totalorder %s87, %s90
      %p99 = scmp.eq.s32.totalorder %s14, 1
      %p100 = por %p98, %p99
      %p101 = scmp.ne.s32.totalorder %s90, %s91
      %p102 = scmp.eq.s32.totalorder %s14, 0
      %p103 = por %p101, %p102
      %p104 = scmp.ne.s32.totalorder %s90, %s91
      %p105 = scmp.eq.s32.totalorder %s15, 1
      %p106 = por %p104, %p105
      %p108 = scmp.ne.s32.totalorder %s91, %s107
      %p109 = scmp.eq.s32.totalorder %s15, 0
      %p110 = por %p108, %p109
      %p111 = scmp.le.s32.totalorder 1, %s9
      %p112 = scmp.lt.s32.totalorder %s9, 3
      %p113 = pnand %p111, %p112
      %p114 = pneg %p113
      // Predicated region
      $region9: #{conv2_forward.1} parent=5 // pred_check
        _
      $region10: #{conv2_forward.1} parent=5 // pred_check_branch
        %116 = sbr.rel (%p113) target = $region12
      $region11: #{conv2_forward.1} parent=5 // pred_region
        %s117 = ssub.s32 %s9, 1
        // Predicated region
        $region13: #{conv2_forward.1} parent=11 // pred_check
          %p118 = pneg %p56
        $region14: #{conv2_forward.1} parent=11 // pred_check_branch
          %120 = sbr.rel (%p118) target = $region16
        $region15: #{conv2_forward.1} parent=11 // pred_region
          _
        $region16: #{conv2_forward.1} parent=11 // pred_fallthru
          _
        // Predicated region
        $region17: #{conv2_forward.1} parent=11 // pred_check
          %p121 = pneg %p77
        $region18: #{conv2_forward.1} parent=11 // pred_check_branch
          %123 = sbr.rel (%p121) target = $region20
        $region19: #{conv2_forward.1} parent=11 // pred_region
          _
        $region20: #{conv2_forward.1} parent=11 // pred_fallthru
          _
      $region12: #{conv2_forward.1} parent=5 // pred_fallthru
        _
      %p124 = scmp.lt.s32.totalorder %s9, 2
      // Predicated region
      $region21: #{conv2_forward.1} parent=5 // pred_check
        %p125 = pneg %p124
      $region22: #{conv2_forward.1} parent=5 // pred_check_branch
        %127 = sbr.rel (%p125) target = $region24
      $region23: #{conv2_forward.1} parent=5 // pred_region
        // Predicated region
        $region25: #{conv2_forward.1} parent=23 // pred_check
          %p128 = pneg %p29
        $region26: #{conv2_forward.1} parent=23 // pred_check_branch
          %130 = sbr.rel (%p128) target = $region28
        $region27: #{conv2_forward.1} parent=23 // pred_region
          %s131 = sand.u32 %s19, 1
          %s132 = sand.u32 %s19, 1
          %s133 = smul.addr %s132, 288
          %s134 = scalar_lea.vmem [#allocation2], %s133
          %s135 = smul.u32 2, %s9
          %s136 = smul.addr %s135, 8
          %s137 = scalar_lea.vmem %s0, %s136
          // Predicated region
          $region29: #{conv2_forward.1} parent=27 // pred_check
            _
          $region30: #{conv2_forward.1} parent=27 // pred_check_branch
            %139 = sbr.rel (0) target = $region32
          $region31: #{conv2_forward.1} parent=27 // pred_region
            // Predicated region
            $region33: #{conv2_forward.1} parent=31 // pred_check
              _
            $region34: #{conv2_forward.1} parent=31 // pred_check_branch
              %141 = sbr.rel (0) target = $region36
            $region35: #{conv2_forward.1} parent=31 // pred_region
              loop: start=0, step=1, limit=1
              $region37: #{conv2_forward.1} parent=35 // loop_pre_header
                _
              $region38: #{conv2_forward.1} parent=35 // loop_header
                %s143 = sphi 0, %s147
                %p144 = scmp.ge.s32.totalorder %s143, 1
                %s148 = sphi %s137, %s137
                %s149 = sphi %s134, %s134
              $region39: #{conv2_forward.1} parent=35 // loop_header_branch
                %146 = sbr.rel (%p144) target = $region43
              $region40: #{conv2_forward.1} parent=35 // loop_body
                %v150 = vld [vmem:[%s148] sm:$0xff]
                %151 = vst [vmem:[%s149] sm:$0xff] %v150
                %v152 = vld [vmem:[%s148 + $0x8] sm:$0xff]
                %153 = vst [vmem:[%s149 + $0x8] sm:$0xff] %v152
                %v154 = vld [vmem:[%s148 + $0x20] sm:$0xff]
                %155 = vst [vmem:[%s149 + $0x10] sm:$0xff] %v154
                %v156 = vld [vmem:[%s148 + $0x28] sm:$0xff]
                %157 = vst [vmem:[%s149 + $0x18] sm:$0xff] %v156
                %v158 = vld [vmem:[%s148 + $0x40] sm:$0xff]
                %159 = vst [vmem:[%s149 + $0x20] sm:$0xff] %v158
                %v160 = vld [vmem:[%s148 + $0x48] sm:$0xff]
                %161 = vst [vmem:[%s149 + $0x28] sm:$0xff] %v160
                %v162 = vld [vmem:[%s148 + $0x60] sm:$0xff]
                %163 = vst [vmem:[%s149 + $0x30] sm:$0xff] %v162
                %v164 = vld [vmem:[%s148 + $0x68] sm:$0xff]
                %165 = vst [vmem:[%s149 + $0x38] sm:$0xff] %v164
                %v166 = vld [vmem:[%s148 + $0x80] sm:$0xff]
                %167 = vst [vmem:[%s149 + $0x40] sm:$0xff] %v166
                %v168 = vld [vmem:[%s148 + $0x88] sm:$0xff]
                %169 = vst [vmem:[%s149 + $0x48] sm:$0xff] %v168
                %v170 = vld [vmem:[%s148 + $0xa0] sm:$0xff]
                %171 = vst [vmem:[%s149 + $0x50] sm:$0xff] %v170
                %v172 = vld [vmem:[%s148 + $0xa8] sm:$0xff]
                %173 = vst [vmem:[%s149 + $0x58] sm:$0xff] %v172
                %v174 = vld [vmem:[%s148 + $0xc0] sm:$0xff]
                %175 = vst [vmem:[%s149 + $0x60] sm:$0xff] %v174
                %v176 = vld [vmem:[%s148 + $0xc8] sm:$0xff]
                %177 = vst [vmem:[%s149 + $0x68] sm:$0xff] %v176
                %v178 = vld [vmem:[%s148 + $0xe0] sm:$0xff]
                %179 = vst [vmem:[%s149 + $0x70] sm:$0xff] %v178
                %v180 = vld [vmem:[%s148 + $0xe8] sm:$0xff]
                %181 = vst [vmem:[%s149 + $0x78] sm:$0xff] %v180
                %v182 = vld [vmem:[%s148 + $0x100] sm:$0xff]
                %183 = vst [vmem:[%s149 + $0x80] sm:$0xff] %v182
                %v184 = vld [vmem:[%s148 + $0x108] sm:$0xff]
                %185 = vst [vmem:[%s149 + $0x88] sm:$0xff] %v184
                %v186 = vld [vmem:[%s148 + $0x120] sm:$0xff]
                %187 = vst [vmem:[%s149 + $0x90] sm:$0xff] %v186
                %v188 = vld [vmem:[%s148 + $0x128] sm:$0xff]
                %189 = vst [vmem:[%s149 + $0x98] sm:$0xff] %v188
                %v190 = vld [vmem:[%s148 + $0x140] sm:$0xff]
                %191 = vst [vmem:[%s149 + $0xa0] sm:$0xff] %v190
                %v192 = vld [vmem:[%s148 + $0x148] sm:$0xff]
                %193 = vst [vmem:[%s149 + $0xa8] sm:$0xff] %v192
                %v194 = vld [vmem:[%s148 + $0x160] sm:$0xff]
                %195 = vst [vmem:[%s149 + $0xb0] sm:$0xff] %v194
                %v196 = vld [vmem:[%s148 + $0x168] sm:$0xff]
                %197 = vst [vmem:[%s149 + $0xb8] sm:$0xff] %v196
                %v198 = vld [vmem:[%s148 + $0x180] sm:$0xff]
                %199 = vst [vmem:[%s149 + $0xc0] sm:$0xff] %v198
                %v200 = vld [vmem:[%s148 + $0x188] sm:$0xff]
                %201 = vst [vmem:[%s149 + $0xc8] sm:$0xff] %v200
                %v202 = vld [vmem:[%s148 + $0x1a0] sm:$0xff]
                %203 = vst [vmem:[%s149 + $0xd0] sm:$0xff] %v202
                %v204 = vld [vmem:[%s148 + $0x1a8] sm:$0xff]
                %205 = vst [vmem:[%s149 + $0xd8] sm:$0xff] %v204
                %v206 = vld [vmem:[%s148 + $0x1c0] sm:$0xff]
                %207 = vst [vmem:[%s149 + $0xe0] sm:$0xff] %v206
                %v208 = vld [vmem:[%s148 + $0x1c8] sm:$0xff]
                %209 = vst [vmem:[%s149 + $0xe8] sm:$0xff] %v208
                %v210 = vld [vmem:[%s148 + $0x1e0] sm:$0xff]
                %211 = vst [vmem:[%s149 + $0xf0] sm:$0xff] %v210
                %v212 = vld [vmem:[%s148 + $0x1e8] sm:$0xff]
                %213 = vst [vmem:[%s149 + $0xf8] sm:$0xff] %v212
                %v214 = vld [vmem:[%s148 + $0x200] sm:$0xff]
                %215 = vst [vmem:[%s149 + $0x100] sm:$0xff] %v214
                %v216 = vld [vmem:[%s148 + $0x208] sm:$0xff]
                %217 = vst [vmem:[%s149 + $0x108] sm:$0xff] %v216
                %v218 = vld [vmem:[%s148 + $0x220] sm:$0xff]
                %219 = vst [vmem:[%s149 + $0x110] sm:$0xff] %v218
                %v220 = vld [vmem:[%s148 + $0x228] sm:$0xff]
                %221 = vst [vmem:[%s149 + $0x118] sm:$0xff] %v220
              $region41: #{conv2_forward.1} parent=35 // loop_footer
                %s147 = sadd.s32 1, %s143
              $region42: #{conv2_forward.1} parent=35 // loop_footer_branch
                %142 = sbr.rel target = $region38
              $region43: #{conv2_forward.1} parent=35 // loop_exit
                _
            $region36: #{conv2_forward.1} parent=31 // pred_fallthru
              _
            // Predicated region
            $region44: #{conv2_forward.1} parent=31 // pred_check
              _
            $region45: #{conv2_forward.1} parent=31 // pred_check_branch
              %223 = sbr.rel target = $region47
            $region46: #{conv2_forward.1} parent=31 // pred_region
              _
            $region47: #{conv2_forward.1} parent=31 // pred_fallthru
              _
          $region32: #{conv2_forward.1} parent=27 // pred_fallthru
            _
          %224 = vnop
        $region28: #{conv2_forward.1} parent=23 // pred_fallthru
          _
      $region24: #{conv2_forward.1} parent=5 // pred_fallthru
        _
      %p225 = scmp.le.s32.totalorder 1, %s9
      %p226 = scmp.lt.s32.totalorder %s9, 3
      %p227 = pnand %p225, %p226
      %p228 = pneg %p227
      // Predicated region
      $region48: #{conv2_forward.1} parent=5 // pred_check
        _
      $region49: #{conv2_forward.1} parent=5 // pred_check_branch
        %230 = sbr.rel (%p227) target = $region51
      $region50: #{conv2_forward.1} parent=5 // pred_region
        %s231 = ssub.s32 %s9, 1
        %s232 = sand.u32 %s22, 1
        %s233 = sand.u32 %s22, 1
        %s234 = smul.addr %s233, 288
        %s235 = scalar_lea.vmem [#allocation2], %s234
        // Predicated region
        $region52: #{conv2_forward.1} parent=50 // pred_check
          %p236 = pneg %p35
        $region53: #{conv2_forward.1} parent=50 // pred_check_branch
          %238 = sbr.rel (%p236) target = $region55
        $region54: #{conv2_forward.1} parent=50 // pred_region
          _
        $region55: #{conv2_forward.1} parent=50 // pred_fallthru
          _
        %s239 = sand.u32 %s22, 1
        %s240 = sand.u32 %s22, 1
        %s241 = smul.addr %s240, 288
        %s242 = scalar_lea.vmem [#allocation2], %s241
        %p243 = pneg %p35
        %p244 = pneg %p32
        %p245 = pneg %p56
        %p246 = pneg %p53
        %p247 = pneg %p77
        %p248 = pneg %p74
        %p249 = pneg %p103
        %p250 = pneg %p100
        %s251 = sand.u32 %s90, 1
        %s252 = sand.u32 %s90, 1
        %s253 = smul.addr %s252, 64
        %s254 = scalar_lea.vmem [#allocation3], %s253
        %s255 = smul.u32 2, %s14
        %s256 = smul.u32 2, %s14
        %v257 = vld [vmem:[%s1] sm:$0xff]
        %v258 = vld [vmem:[%s1 + $0x8] sm:$0xff]
        %v259 = vld [vmem:[%s1 + $0x10] sm:$0xff]
        %v260 = vld [vmem:[%s1 + $0x18] sm:$0xff]
        %v261 = vld [vmem:[%s1 + $0x20] sm:$0xff]
        %v262 = vld [vmem:[%s1 + $0x28] sm:$0xff]
        %v263 = vld [vmem:[%s1 + $0x30] sm:$0xff]
        %v264 = vld [vmem:[%s1 + $0x38] sm:$0xff]
        %v265 = vld [vmem:[%s235] sm:$0xff]
        %v266 = vld [vmem:[%s235 + $0x8] sm:$0xff]
        %v267 = vld [vmem:[%s235 + $0x10] sm:$0xff]
        %v268 = vld [vmem:[%s235 + $0x18] sm:$0xff]
        %v269 = vld [vmem:[%s235 + $0x20] sm:$0xff]
        %v270 = vld [vmem:[%s235 + $0x28] sm:$0xff]
        %v271 = vld [vmem:[%s235 + $0x30] sm:$0xff]
        %v272 = vld [vmem:[%s235 + $0x38] sm:$0xff]
        %v273 = vld [vmem:[%s235 + $0x40] sm:$0xff]
        %v274 = vld [vmem:[%s235 + $0x48] sm:$0xff]
        %v275 = vld [vmem:[%s235 + $0x50] sm:$0xff]
        %v276 = vld [vmem:[%s235 + $0x58] sm:$0xff]
        %v277 = vld [vmem:[%s235 + $0x60] sm:$0xff]
        %v278 = vld [vmem:[%s235 + $0x68] sm:$0xff]
        %v279 = vld [vmem:[%s235 + $0x70] sm:$0xff]
        %v280 = vld [vmem:[%s235 + $0x78] sm:$0xff]
        %v281 = vld [vmem:[%s235 + $0x80] sm:$0xff]
        %v282 = vld [vmem:[%s235 + $0x88] sm:$0xff]
        %v283 = vld [vmem:[%s235 + $0x90] sm:$0xff]
        %v284 = vld [vmem:[%s235 + $0x98] sm:$0xff]
        %v285 = vld [vmem:[%s235 + $0xa0] sm:$0xff]
        %v286 = vld [vmem:[%s235 + $0xa8] sm:$0xff]
        %v287 = vld [vmem:[%s235 + $0xb0] sm:$0xff]
        %v288 = vld [vmem:[%s235 + $0xb8] sm:$0xff]
        %v289 = vld [vmem:[%s235 + $0xc0] sm:$0xff]
        %v290 = vld [vmem:[%s235 + $0xc8] sm:$0xff]
        %v291 = vld [vmem:[%s235 + $0xd0] sm:$0xff]
        %v292 = vld [vmem:[%s235 + $0xd8] sm:$0xff]
        %v293 = vld [vmem:[%s235 + $0xe0] sm:$0xff]
        %v294 = vld [vmem:[%s235 + $0xe8] sm:$0xff]
        %v295 = vld [vmem:[%s235 + $0xf0] sm:$0xff]
        %v296 = vld [vmem:[%s235 + $0xf8] sm:$0xff]
        %v297 = vld [vmem:[%s235 + $0x100] sm:$0xff]
        %v298 = vld [vmem:[%s235 + $0x108] sm:$0xff]
        %v299 = vld [vmem:[%s235 + $0x110] sm:$0xff]
        %v300 = vld [vmem:[%s235 + $0x118] sm:$0xff]
        %v301 = vld [vmem:[%s2] sm:$0xff]
        %v302 = vld [vmem:[%s2 + $0x8] sm:$0xff]
        %v303 = vld [vmem:[%s2 + $0x10] sm:$0xff]
        %v304 = vld [vmem:[%s2 + $0x18] sm:$0xff]
        %306 = vset.pattern.permute.xlu0 0
        %307 = vperm.xlu0 %306, %v301
        %v308 = vpop.permute.xlu0 %307
        %311 = vset.pattern.permute.xlu0 0
        %312 = vperm.xlu0 %311, %v302
        %v313 = vpop.permute.xlu0 %312
        %316 = vset.pattern.permute.xlu0 0
        %317 = vperm.xlu0 %316, %v303
        %v318 = vpop.permute.xlu0 %317
        %321 = vset.pattern.permute.xlu0 0
        %322 = vperm.xlu0 %321, %v304
        %v323 = vpop.permute.xlu0 %322
        %vm325 = vcmask 130048
        %v327 = vsel %vm325, %v258, 0
        %v330 = vsel %vm325, %v260, 0
        %v333 = vsel %vm325, %v262, 0
        %v336 = vsel %vm325, %v264, 0
        %338 = vmatprep.subr.mxu0 %v266
        %339 = vmatpush1.msra.mxu0 %v265
        %340 = vmatprep.subr.mxu0 %v268
        %341 = vmatpush1.msra.mxu0 %v267
        %342 = vmatprep.subr.mxu0 %v270
        %343 = vmatpush1.msra.mxu0 %v269
        %344 = vmatprep.subr.mxu0 %v272
        %345 = vmatpush1.msra.mxu0 %v271
        %346 = vmatprep.subr.mxu0 %v274
        %347 = vmatpush1.msra.mxu0 %v273
        %348 = vmatprep.subr.mxu0 %v276
        %349 = vmatpush1.msra.mxu0 %v275
        %350 = vmatprep.subr.mxu0 %v278
        %351 = vmatpush1.msra.mxu0 %v277
        %352 = vmatprep.subr.mxu0 %v280
        %353 = vmatpush1.msra.mxu0 %v279
        %354 = vmatprep.subr.mxu0 %v282
        %355 = vmatpush1.msra.mxu0 %v281
        %356 = vmatprep.subr.mxu0 %v284
        %357 = vmatpush1.msra.mxu0 %v283
        %358 = vmatprep.subr.mxu0 %v286
        %359 = vmatpush1.msra.mxu0 %v285
        %360 = vmatprep.subr.mxu0 %v288
        %361 = vmatpush1.msra.mxu0 %v287
        %362 = vmatprep.subr.mxu0 %v290
        %363 = vmatpush1.msra.mxu0 %v289
        %364 = vmatprep.subr.mxu0 %v292
        %365 = vmatpush1.msra.mxu0 %v291
        %366 = vmatprep.subr.mxu0 %v294
        %367 = vmatpush1.msra.mxu0 %v293
        %368 = vmatprep.subr.mxu0 %v296
        %369 = vmatpush1.msra.mxu0 %v295
        %370 = vmatprep.subr.mxu0 %v298
        %371 = vmatpush1.msra.mxu0 %v297
        %372 = vmatprep.subr.mxu0 %v300
        %373 = vmatpush1.msra.mxu0 %v299
        %374 = vmatprep.subr.mxu0 0.0
        %375 = vmatpush1.msra.mxu0 0.0
        %376 = vmatprep.subr.mxu0 0.0
        %377 = vmatpush1.msra.mxu0 0.0
        %378 = vmatprep.subr.mxu0 0.0
        %379 = vmatpush1.msra.mxu0 0.0
        %380 = vmatprep.subr.mxu0 0.0
        %381 = vmatpush1.msra.mxu0 0.0
        %382 = vmatprep.subr.mxu0 0.0
        %383 = vmatpush1.msra.mxu0 0.0
        %384 = vmatprep.subr.mxu0 0.0
        %385 = vmatpush1.msra.mxu0 0.0
        %386 = vmatprep.subr.mxu0 0.0
        %387 = vmatpush1.msra.mxu0 0.0
        %388 = vmatprep.subr.mxu0 0.0
        %389 = vmatpush1.msra.mxu0 0.0
        %390 = vmatprep.subr.mxu0 0.0
        %391 = vmatpush1.msra.mxu0 0.0
        %392 = vmatprep.subr.mxu0 0.0
        %393 = vmatpush1.msra.mxu0 0.0
        %394 = vmatprep.subr.mxu0 0.0
        %395 = vmatpush1.msra.mxu0 0.0
        %396 = vmatprep.subr.mxu0 0.0
        %397 = vmatpush1.msra.mxu0 0.0
        %398 = vmatprep.subr.mxu0 0.0
        %399 = vmatpush1.msra.mxu0 0.0
        %400 = vmatprep.subr.mxu0 0.0
        %401 = vmatpush1.msra.mxu0 0.0
        %402 = vmatprep.mubr.f32.mxu0 %v327
        %403 = vmatmul.mubr.f32.gmra.mrb[0].mxu0 %v257
        %v404 = vpop.f32.mrb[0].mxu0
        %v405 = vadd.f32 %v308, %v404
        %v406 = vpop.f32.mrb[0].mxu0
        %v407 = vadd.f32 %v308, %v406
        %408 = vmatprep.mubr.f32.mxu0 %v330
        %409 = vmatmul.mubr.f32.gmra.mrb[0].mxu0 %v259
        %v410 = vpop.f32.mrb[0].mxu0
        %v411 = vadd.f32 %v313, %v410
        %v412 = vpop.f32.mrb[0].mxu0
        %v413 = vadd.f32 %v313, %v412
        %414 = vmatprep.mubr.f32.mxu0 %v333
        %415 = vmatmul.mubr.f32.gmra.mrb[0].mxu0 %v261
        %v416 = vpop.f32.mrb[0].mxu0
        %v417 = vadd.f32 %v318, %v416
        %v418 = vpop.f32.mrb[0].mxu0
        %v419 = vadd.f32 %v318, %v418
        %420 = vmatprep.mubr.f32.mxu0 %v336
        %421 = vmatmul.mubr.f32.gmra.mrb[0].mxu0 %v263
        %v422 = vpop.f32.mrb[0].mxu0
        %v423 = vadd.f32 %v323, %v422
        %v424 = vpop.f32.mrb[0].mxu0
        %v425 = vadd.f32 %v323, %v424
        %426 = vdwg.mxu0
        %v427 = vxor.u32 %v405, 2147483648
        %v428 = vxor.u32 %v407, 2147483648
        %v429 = vxor.u32 %v411, 2147483648
        %v430 = vxor.u32 %v413, 2147483648
        %v431 = vxor.u32 %v417, 2147483648
        %v432 = vxor.u32 %v419, 2147483648
        %v433 = vxor.u32 %v423, 2147483648
        %v434 = vxor.u32 %v425, 2147483648
        %v435 = vmul.f32 %v427, 1.442695
        %v436 = vpow.pop %v435
        %v437 = vmul.f32 %v428, 1.442695
        %v438 = vpow.pop %v437
        %v439 = vmul.f32 %v429, 1.442695
        %v440 = vpow.pop %v439
        %v441 = vmul.f32 %v430, 1.442695
        %v442 = vpow.pop %v441
        %v443 = vmul.f32 %v431, 1.442695
        %v444 = vpow.pop %v443
        %v445 = vmul.f32 %v432, 1.442695
        %v446 = vpow.pop %v445
        %v447 = vmul.f32 %v433, 1.442695
        %v448 = vpow.pop %v447
        %v449 = vmul.f32 %v434, 1.442695
        %v450 = vpow.pop %v449
        %v451 = vadd.f32 %v436, 1.0
        %v452 = vadd.f32 %v438, 1.0
        %v453 = vadd.f32 %v440, 1.0
        %v454 = vadd.f32 %v442, 1.0
        %v455 = vadd.f32 %v444, 1.0
        %v456 = vadd.f32 %v446, 1.0
        %v457 = vadd.f32 %v448, 1.0
        %v458 = vadd.f32 %v450, 1.0
        %v459 = vrcp.pop %v451
        %v460 = vmul.f32 1.0, %v459
        %v461 = vrcp.pop %v452
        %v462 = vmul.f32 1.0, %v461
        %v463 = vrcp.pop %v453
        %v464 = vmul.f32 1.0, %v463
        %v465 = vrcp.pop %v454
        %v466 = vmul.f32 1.0, %v465
        %v467 = vrcp.pop %v455
        %v468 = vmul.f32 1.0, %v467
        %v469 = vrcp.pop %v456
        %v470 = vmul.f32 1.0, %v469
        %v471 = vrcp.pop %v457
        %v472 = vmul.f32 1.0, %v471
        %v473 = vrcp.pop %v458
        %v474 = vmul.f32 1.0, %v473
        %v475 = vmul.f32 %v405, %v460
        %v476 = vmul.f32 %v407, %v462
        %v477 = vmul.f32 %v411, %v464
        %v478 = vmul.f32 %v413, %v466
        %v479 = vmul.f32 %v417, %v468
        %v480 = vmul.f32 %v419, %v470
        %v481 = vmul.f32 %v423, %v472
        %v482 = vmul.f32 %v425, %v474
        %483 = vst [vmem:[%s254] sm:$0xff] %v475
        %484 = vst [vmem:[%s254 + $0x8] sm:$0xff] %v476
        %485 = vst [vmem:[%s254 + $0x10] sm:$0xff] %v477
        %486 = vst [vmem:[%s254 + $0x18] sm:$0xff] %v478
        %487 = vst [vmem:[%s254 + $0x20] sm:$0xff] %v479
        %488 = vst [vmem:[%s254 + $0x28] sm:$0xff] %v480
        %489 = vst [vmem:[%s254 + $0x30] sm:$0xff] %v481
        %490 = vst [vmem:[%s254 + $0x38] sm:$0xff] %v482
        %s491 = sand.u32 %s90, 1
        %s492 = sand.u32 %s90, 1
        %s493 = smul.addr %s492, 64
        %s494 = scalar_lea.vmem [#allocation3], %s493
        // Predicated region
        $region56: #{conv2_forward.1} parent=50 // pred_check
          %p495 = pneg %p100
        $region57: #{conv2_forward.1} parent=50 // pred_check_branch
          %497 = sbr.rel (%p495) target = $region59
        $region58: #{conv2_forward.1} parent=50 // pred_region
          %s498 = smul.u32 2, %s14
          %s499 = smul.addr %s498, 8
          %s500 = scalar_lea.vmem %s3, %s499
          // Predicated region
          $region60: #{conv2_forward.1} parent=58 // pred_check
            _
          $region61: #{conv2_forward.1} parent=58 // pred_check_branch
            %502 = sbr.rel (0) target = $region63
          $region62: #{conv2_forward.1} parent=58 // pred_region
            // Predicated region
            $region64: #{conv2_forward.1} parent=62 // pred_check
              _
            $region65: #{conv2_forward.1} parent=62 // pred_check_branch
              %504 = sbr.rel (0) target = $region67
            $region66: #{conv2_forward.1} parent=62 // pred_region
              loop: start=0, step=1, limit=1
              $region68: #{conv2_forward.1} parent=66 // loop_pre_header
                _
              $region69: #{conv2_forward.1} parent=66 // loop_header
                %s506 = sphi 0, %s510
                %p507 = scmp.ge.s32.totalorder %s506, 1
                %s511 = sphi %s494, %s494
                %s512 = sphi %s500, %s500
              $region70: #{conv2_forward.1} parent=66 // loop_header_branch
                %509 = sbr.rel (%p507) target = $region74
              $region71: #{conv2_forward.1} parent=66 // loop_body
                %v513 = vld [vmem:[%s511] sm:$0xff]
                %514 = vst [vmem:[%s512] sm:$0xff] %v513
                %v515 = vld [vmem:[%s511 + $0x8] sm:$0xff]
                %516 = vst [vmem:[%s512 + $0x8] sm:$0xff] %v515
                %v517 = vld [vmem:[%s511 + $0x10] sm:$0xff]
                %518 = vst [vmem:[%s512 + $0x20] sm:$0xff] %v517
                %v519 = vld [vmem:[%s511 + $0x18] sm:$0xff]
                %520 = vst [vmem:[%s512 + $0x28] sm:$0xff] %v519
                %v521 = vld [vmem:[%s511 + $0x20] sm:$0xff]
                %522 = vst [vmem:[%s512 + $0x40] sm:$0xff] %v521
                %v523 = vld [vmem:[%s511 + $0x28] sm:$0xff]
                %524 = vst [vmem:[%s512 + $0x48] sm:$0xff] %v523
                %v525 = vld [vmem:[%s511 + $0x30] sm:$0xff]
                %526 = vst [vmem:[%s512 + $0x60] sm:$0xff] %v525
                %v527 = vld [vmem:[%s511 + $0x38] sm:$0xff]
                %528 = vst [vmem:[%s512 + $0x68] sm:$0xff] %v527
              $region72: #{conv2_forward.1} parent=66 // loop_footer
                %s510 = sadd.s32 1, %s506
              $region73: #{conv2_forward.1} parent=66 // loop_footer_branch
                %505 = sbr.rel target = $region69
              $region74: #{conv2_forward.1} parent=66 // loop_exit
                _
            $region67: #{conv2_forward.1} parent=62 // pred_fallthru
              _
            // Predicated region
            $region75: #{conv2_forward.1} parent=62 // pred_check
              _
            $region76: #{conv2_forward.1} parent=62 // pred_check_branch
              %530 = sbr.rel target = $region78
            $region77: #{conv2_forward.1} parent=62 // pred_region
              _
            $region78: #{conv2_forward.1} parent=62 // pred_fallthru
              _
          $region63: #{conv2_forward.1} parent=58 // pred_fallthru
            _
          %531 = vnop
        $region59: #{conv2_forward.1} parent=50 // pred_fallthru
          _
      $region51: #{conv2_forward.1} parent=5 // pred_fallthru
        _
      %p532 = scmp.le.s32.totalorder 2, %s9
      // Predicated region
      $region79: #{conv2_forward.1} parent=5 // pred_check
        %p533 = pneg %p532
      $region80: #{conv2_forward.1} parent=5 // pred_check_branch
        %535 = sbr.rel (%p533) target = $region82
      $region81: #{conv2_forward.1} parent=5 // pred_region
        %s536 = ssub.s32 %s9, 2
        // Predicated region
        $region83: #{conv2_forward.1} parent=81 // pred_check
          %p537 = pneg %p106
        $region84: #{conv2_forward.1} parent=81 // pred_check_branch
          %539 = sbr.rel (%p537) target = $region86
        $region85: #{conv2_forward.1} parent=81 // pred_region
          %s540 = sand.u32 %s91, 1
          %s541 = sand.u32 %s91, 1
          %s542 = smul.addr %s541, 64
          %s543 = scalar_lea.vmem [#allocation3], %s542
        $region86: #{conv2_forward.1} parent=81 // pred_fallthru
          _
      $region82: #{conv2_forward.1} parent=5 // pred_fallthru
        _
    $region6: #{conv2_forward.1} parent=1 // loop_footer
      %s13 = sadd.s32 1, %s9
    $region7: #{conv2_forward.1} parent=1 // loop_footer_branch
      %8 = sbr.rel target = $region3
    $region8: #{conv2_forward.1} parent=1 // loop_exit
      _

</llo_original>
